<compile_context>
chip_gen: v6e
topology: v6e:2x2x1
jax: 0.10.0
libtpu: 0.0.40
codegen_flags: <defaults>
</compile_context>

<pallas_src>
import jax
import jax.numpy as jnp
from jax.experimental import pallas as pl
from jax.experimental.pallas import tpu as pltpu

VOCAB = 32
EMBED = 16
HIDDEN = 32
BATCH = 8


# ---------------------------------------------------------------------------
# Shared GRU-step math (traced inside the kernels, all operands in VMEM/vregs)
# ---------------------------------------------------------------------------
def _gru_step(tok, h, w_rz, w_n, b_rz, b_n):
    """One GRU step for the whole batch.

    tok  : (B, 1) int32 raw token ids (clamped to index 2 if >= vocab_size).
    h    : (B, H) float32 previous hidden.
    w_rz : (V+H, 2H)  [[emb@W_ir | emb@W_iz]; [W_hr | W_hz]] fused weights.
    w_n  : (V+H, 2H)  block-diag(emb@W_in, W_hn) — keeps x / h parts separate.
    b_rz : (1, 2H) combined input+hidden biases for r | z.
    b_n  : (1, 2H) [b_in | b_hn] (kept separate per PyTorch GRU semantics).
    Returns the new hidden (B, H) float32.
    """
    B = tok.shape[0]
    H = HIDDEN
    V = VOCAB

    # OOV clamp + one-hot encoding: the embedding lookup becomes part of the
    # fused MXU matmul against the (V+H, 2H) weights.
    tok = jnp.where(tok >= V, jnp.int32(2), tok)                      # (B, 1)
    lane_ids = jax.lax.broadcasted_iota(jnp.int32, (B, V), 1)         # (B, V)
    onehot = (lane_ids == tok).astype(jnp.float32)                    # (B, V)
    xcat = jnp.concatenate([onehot, h], axis=-1)                      # (B, V+H)

    dot = lambda a, b: jnp.dot(a, b, preferred_element_type=jnp.float32)

    g_rz = dot(xcat, w_rz) + b_rz                                     # (B, 2H)
    r = jax.nn.sigmoid(g_rz[:, :H])
    z = jax.nn.sigmoid(g_rz[:, H:])

    g_n = dot(xcat, w_n) + b_n               # (B, 2H) = [W_in x + b_in | W_hn h + b_hn]
    n = jnp.tanh(g_n[:, :H] + r * g_n[:, H:])

    return (1.0 - z) * n + z * h


# ---------------------------------------------------------------------------
# Kernels
# ---------------------------------------------------------------------------
def _encoder_step_kernel(tok_ref, h_ref, w_rz_ref, w_n_ref, b_rz_ref, b_n_ref,
                         out_ref):
    """Single GRU step (the module's forward: seq_len == 1). No grid."""
    out_ref[...] = _gru_step(
        tok_ref[...], h_ref[...],
        w_rz_ref[...], w_n_ref[...],
        b_rz_ref[...], b_n_ref[...])


def _encoder_seq_kernel(tok_ref, h0_ref, w_rz_ref, w_n_ref, b_rz_ref, b_n_ref,
                        out_ref, h_scr):
    """T fused GRU steps: grid over time, hidden carried in VMEM scratch."""
    t = pl.program_id(0)

    @pl.when(t == 0)
    def _():
        h_scr[...] = h0_ref[...]

    h_new = _gru_step(
        tok_ref[0], h_scr[...],
        w_rz_ref[...], w_n_ref[...],
        b_rz_ref[...], b_n_ref[...])

    h_scr[...] = h_new
    out_ref[...] = h_new[None]          # (1, B, H) output slab for step t
    # TODO(synk): for very long sequences a lane-dense (B, T*H) output layout
    # would avoid 32-lane masked stores; kept (T, B, H) for PyTorch parity.


# ---------------------------------------------------------------------------
# Parameter preparation (one-time, outside the hot path)
# ---------------------------------------------------------------------------
def init_params(key):
    """Synthetic parameters with nn.Embedding + nn.GRU shapes / init ranges."""
    k0, k1, k2, k3, k4 = jax.random.split(key, 5)
    bound = 1.0 / jnp.sqrt(HIDDEN)
    emb = jax.random.normal(k0, (VOCAB, EMBED), jnp.float32)
    # PyTorch stores weight_ih_l0 as (3H, E); we keep the transposed layout,
    # gate order along 3H is PyTorch's (r, z, n).
    wih_t = jax.random.uniform(k1, (EMBED, 3 * HIDDEN), jnp.float32, -bound, bound)
    whh_t = jax.random.uniform(k2, (HIDDEN, 3 * HIDDEN), jnp.float32, -bound, bound)
    bih = jax.random.uniform(k3, (1, 3 * HIDDEN), jnp.float32, -bound, bound)
    bhh = jax.random.uniform(k4, (1, 3 * HIDDEN), jnp.float32, -bound, bound)
    return {"emb": emb, "wih_t": wih_t, "whh_t": whh_t, "bih": bih, "bhh": bhh}


def prepare_params(params):
    """Fold the embedding into the input weights and pack per-gate blocks."""
    H = HIDDEN
    # (V, 3H): one-hot @ (emb @ W_ih^T)  ==  embedding lookup + input matmul.
    ew = jnp.dot(params["emb"], params["wih_t"],
                 precision=jax.lax.Precision.HIGHEST)
    whh_t, bih, bhh = params["whh_t"], params["bih"], params["bhh"]

    # r/z: one fused matmul over [one-hot | h].
    w_rz = jnp.concatenate([ew[:, :2 * H], whh_t[:, :2 * H]], axis=0)     # (V+H, 2H)
    # n: block-diagonal so W_in x and W_hn h land in separate lane halves.
    w_n = jnp.concatenate([
        jnp.concatenate([ew[:, 2 * H:], jnp.zeros((VOCAB, H), jnp.float32)], axis=1),
        jnp.concatenate([jnp.zeros((H, H), jnp.float32), whh_t[:, 2 * H:]], axis=1),
    ], axis=0)                                                             # (V+H, 2H)

    b_rz = bih[:, :2 * H] + bhh[:, :2 * H]                                 # (1, 2H)
    b_n = jnp.concatenate([bih[:, 2 * H:], bhh[:, 2 * H:]], axis=1)        # (1, 2H)
    return {"w_rz": w_rz, "w_n": w_n, "b_rz": b_rz, "b_n": b_n}


def _fused_args(fused):
    return (fused["w_rz"], fused["w_n"], fused["b_rz"], fused["b_n"])


# ---------------------------------------------------------------------------
# Wrappers
# ---------------------------------------------------------------------------
def encoder_forward(tokens, hidden, fused):
    """Replicates Encoder.forward(input, hidden) for seq_len == 1.

    tokens: (B,) int32 token ids.
    hidden: (1, B, H) float32 initial GRU hidden state.
    Returns (output, hidden), each (1, B, H) (identical arrays, as in the
    PyTorch module where output == new hidden for a single step).
    """
    B = tokens.shape[0]
    tok2d = tokens.reshape(B, 1).astype(jnp.int32)
    h0 = hidden.reshape(B, HIDDEN).astype(jnp.float32)

    h_new = pl.pallas_call(
        _encoder_step_kernel,
        out_shape=jax.ShapeDtypeStruct((B, HIDDEN), jnp.float32),
    )(tok2d, h0, *_fused_args(fused))

    out = h_new.reshape(1, B, HIDDEN)
    return out, out


def encoder_forward_seq(tokens_seq, hidden, fused):
    """Fused multi-step variant: T single-token GRU steps in ONE pallas_call.

    tokens_seq: (T, B) int32; hidden: (1, B, H) float32.
    Returns (outputs (T, B, H), final hidden (1, B, H)).
    """
    T, B = tokens_seq.shape
    tok3d = tokens_seq.reshape(T, B, 1).astype(jnp.int32)
    h0 = hidden.reshape(B, HIDDEN).astype(jnp.float32)

    const = lambda shape: pl.BlockSpec(shape, lambda t: (0,) * len(shape))

    outs = pl.pallas_call(
        _encoder_seq_kernel,
        out_shape=jax.ShapeDtypeStruct((T, B, HIDDEN), jnp.float32),
        grid=(T,),
        in_specs=[
            pl.BlockSpec((1, B, 1), lambda t: (t, 0, 0)),   # tokens for step t
            const((B, HIDDEN)),                             # h0 (VMEM-resident)
            const((VOCAB + HIDDEN, 2 * HIDDEN)),            # w_rz
            const((VOCAB + HIDDEN, 2 * HIDDEN)),            # w_n
            const((1, 2 * HIDDEN)),                         # b_rz
            const((1, 2 * HIDDEN)),                         # b_n
        ],
        out_specs=pl.BlockSpec((1, B, HIDDEN), lambda t: (t, 0, 0)),
        scratch_shapes=[pltpu.VMEM((B, HIDDEN), jnp.float32)],
        compiler_params=pltpu.CompilerParams(
            dimension_semantics=("arbitrary",)),   # carried hidden state
    )(tok3d, h0, *_fused_args(fused))

    return outs, outs[-1].reshape(1, B, HIDDEN)


# ---------------------------------------------------------------------------
# Pure-JAX reference (same math as the PyTorch module)
# ---------------------------------------------------------------------------
def _reference_step(tokens, h, params):
    """tokens: (B,) int32, h: (B, H) f32 -> new hidden (B, H) f32."""
    clamped = jnp.where(tokens >= VOCAB, jnp.int32(2), tokens)
    x = params["emb"][clamped]                               # (B, E)
    gi = x @ params["wih_t"] + params["bih"]
    gh = h @ params["whh_t"] + params["bhh"]
    H = HIDDEN
    r = jax.nn.sigmoid(gi[:, :H] + gh[:, :H])
    z = jax.nn.sigmoid(gi[:, H:2 * H] + gh[:, H:2 * H])
    n = jnp.tanh(gi[:, 2 * H:] + r * gh[:, 2 * H:])
    return (1.0 - z) * n + z * h


if __name__ == "__main__":
    key = jax.random.PRNGKey(0)
    kp, kt, ks = jax.random.split(key, 3)
    params = init_params(kp)
    fused = prepare_params(params)

    # Include tokens >= VOCAB to exercise the OOV clamp.  (Negative ids are
    # not guarded — same behavior as the PyTorch module.)
    tokens = jax.random.randint(kt, (BATCH,), 0, VOCAB + 6, dtype=jnp.int32)
    hidden0 = jnp.zeros((1, BATCH, HIDDEN), jnp.float32)     # Encoder.initHidden

    # --- single-step forward (module semantics) ---
    out, hid = encoder_forward(tokens, hidden0, fused)
    out = jax.block_until_ready(out)

    h_ref = _reference_step(tokens, hidden0.reshape(BATCH, HIDDEN), params)
    assert out.shape == (1, BATCH, HIDDEN) and hid.shape == (1, BATCH, HIDDEN)
    assert jnp.allclose(out.reshape(BATCH, HIDDEN), h_ref, atol=2e-5), \
        "output mismatch vs reference"
    assert jnp.allclose(hid.reshape(BATCH, HIDDEN), h_ref, atol=2e-5), \
        "hidden mismatch vs reference"

    # --- fused multi-step variant (amortizes launch/DMA overhead over T) ---
    SEQ = 8
    tok_seq = jax.random.randint(ks, (SEQ, BATCH), 0, VOCAB + 6, dtype=jnp.int32)
    seq_out, seq_hid = encoder_forward_seq(tok_seq, hidden0, fused)
    seq_out = jax.block_until_ready(seq_out)

    h = hidden0.reshape(BATCH, HIDDEN)
    for t in range(SEQ):
        h = _reference_step(tok_seq[t], h, params)
        assert jnp.allclose(seq_out[t], h, atol=1e-4), f"seq mismatch at step {t}"
    assert jnp.allclose(seq_hid.reshape(BATCH, HIDDEN), h, atol=1e-4), \
        "final hidden mismatch vs reference"

    print("KERNEL_OK")
</pallas_src>

<mosaic_0001>
module attributes {stable_mosaic.version = 11 : i64} {
  func.func @_encoder_step_kernel(%arg0: memref<8x1xi32, #tpu.memory_space<vmem>>, %arg1: memref<8x32xf32, #tpu.memory_space<vmem>>, %arg2: memref<64x64xf32, #tpu.memory_space<vmem>>, %arg3: memref<64x64xf32, #tpu.memory_space<vmem>>, %arg4: memref<1x64xf32, #tpu.memory_space<vmem>>, %arg5: memref<1x64xf32, #tpu.memory_space<vmem>>, %arg6: memref<8x32xf32, #tpu.memory_space<vmem>>) attributes {dimension_semantics = [], scalar_prefetch = 0 : i64, scratch_operands = 0 : i64, tpu.core_type = #tpu.core_type<tc>} {
    %c0 = arith.constant 0 : index
    %c0_0 = arith.constant 0 : index
    %0 = vector.load %arg0[%c0, %c0_0] : memref<8x1xi32, #tpu.memory_space<vmem>>, vector<8x1xi32>
    %c0_1 = arith.constant 0 : index
    %c0_2 = arith.constant 0 : index
    %1 = vector.load %arg1[%c0_1, %c0_2] : memref<8x32xf32, #tpu.memory_space<vmem>>, vector<8x32xf32>
    %c0_3 = arith.constant 0 : index
    %c0_4 = arith.constant 0 : index
    %2 = vector.load %arg2[%c0_3, %c0_4] : memref<64x64xf32, #tpu.memory_space<vmem>>, vector<64x64xf32>
    %c0_5 = arith.constant 0 : index
    %c0_6 = arith.constant 0 : index
    %3 = vector.load %arg3[%c0_5, %c0_6] : memref<64x64xf32, #tpu.memory_space<vmem>>, vector<64x64xf32>
    %c0_7 = arith.constant 0 : index
    %c0_8 = arith.constant 0 : index
    %4 = vector.load %arg4[%c0_7, %c0_8] : memref<1x64xf32, #tpu.memory_space<vmem>>, vector<1x64xf32>
    %c0_9 = arith.constant 0 : index
    %c0_10 = arith.constant 0 : index
    %5 = vector.load %arg5[%c0_9, %c0_10] : memref<1x64xf32, #tpu.memory_space<vmem>>, vector<1x64xf32>
    %c32_i32 = arith.constant 32 : i32
    %6 = vector.broadcast %c32_i32 : i32 to vector<8x1xi32>
    %7 = arith.cmpi sge, %0, %6 : vector<8x1xi32>
    %c2_i32 = arith.constant 2 : i32
    %8 = vector.broadcast %c2_i32 : i32 to vector<8x1xi32>
    %9 = arith.select %7, %8, %0 : vector<8x1xi1>, vector<8x1xi32>
    %10 = tpu.iota {dimensions = array<i32: 1>} : vector<8x32xi32>
    %11 = vector.broadcast %9 : vector<8x1xi32> to vector<8x32xi32>
    %12 = arith.cmpi eq, %10, %11 : vector<8x32xi32>
    %13 = arith.extui %12 : vector<8x32xi1> to vector<8x32xi32>
    %14 = arith.sitofp %13 : vector<8x32xi32> to vector<8x32xf32>
    %15 = tpu.concatenate %14, %1 in 1 : vector<8x32xf32>, vector<8x32xf32> -> vector<8x64xf32>
    %cst = arith.constant dense<0.000000e+00> : vector<8x64xf32>
    %16 = tpu.matmul %15, %2, %cst {dimension_numbers = #tpu.dot_dimension_numbers<[1], [0], [0], [1], [0, 0, 1, 1], [], []>} : vector<8x64xf32>, vector<64x64xf32>, vector<8x64xf32> -> vector<8x64xf32>
    %17 = vector.broadcast %4 : vector<1x64xf32> to vector<8x64xf32>
    %18 = arith.addf %16, %17 : vector<8x64xf32>
    %19 = vector.extract_strided_slice %18 {offsets = [0, 0], sizes = [8, 32], strides = [1, 1]} : vector<8x64xf32> to vector<8x32xf32>
    %20 = arith.negf %19 : vector<8x32xf32>
    %21 = math.exp %20 : vector<8x32xf32>
    %cst_11 = arith.constant 1.000000e+00 : f32
    %22 = vector.broadcast %cst_11 : f32 to vector<8x32xf32>
    %23 = arith.addf %22, %21 : vector<8x32xf32>
    %24 = arith.divf %22, %23 : vector<8x32xf32>
    %25 = vector.extract_strided_slice %18 {offsets = [0, 32], sizes = [8, 32], strides = [1, 1]} : vector<8x64xf32> to vector<8x32xf32>
    %26 = arith.negf %25 : vector<8x32xf32>
    %27 = math.exp %26 : vector<8x32xf32>
    %cst_12 = arith.constant 1.000000e+00 : f32
    %28 = vector.broadcast %cst_12 : f32 to vector<8x32xf32>
    %29 = arith.addf %28, %27 : vector<8x32xf32>
    %30 = arith.divf %28, %29 : vector<8x32xf32>
    %cst_13 = arith.constant dense<0.000000e+00> : vector<8x64xf32>
    %31 = tpu.matmul %15, %3, %cst_13 {dimension_numbers = #tpu.dot_dimension_numbers<[1], [0], [0], [1], [0, 0, 1, 1], [], []>} : vector<8x64xf32>, vector<64x64xf32>, vector<8x64xf32> -> vector<8x64xf32>
    %32 = vector.broadcast %5 : vector<1x64xf32> to vector<8x64xf32>
    %33 = arith.addf %31, %32 : vector<8x64xf32>
    %34 = vector.extract_strided_slice %33 {offsets = [0, 0], sizes = [8, 32], strides = [1, 1]} : vector<8x64xf32> to vector<8x32xf32>
    %35 = vector.extract_strided_slice %33 {offsets = [0, 32], sizes = [8, 32], strides = [1, 1]} : vector<8x64xf32> to vector<8x32xf32>
    %36 = arith.mulf %24, %35 : vector<8x32xf32>
    %37 = arith.addf %34, %36 : vector<8x32xf32>
    %38 = math.tanh %37 : vector<8x32xf32>
    %cst_14 = arith.constant 1.000000e+00 : f32
    %39 = vector.broadcast %cst_14 : f32 to vector<8x32xf32>
    %40 = arith.subf %39, %30 : vector<8x32xf32>
    %41 = arith.mulf %40, %38 : vector<8x32xf32>
    %42 = arith.mulf %30, %1 : vector<8x32xf32>
    %43 = arith.addf %41, %42 : vector<8x32xf32>
    %c0_15 = arith.constant 0 : index
    %c0_16 = arith.constant 0 : index
    %44 = vector.load %arg6[%c0_15, %c0_16] : memref<8x32xf32, #tpu.memory_space<vmem>>, vector<8x32xf32>
    tpu.vector_store %arg6[%c0_15, %c0_16], %43 {strides = array<i32>} : memref<8x32xf32, #tpu.memory_space<vmem>>, vector<8x32xf32>,
    return
  }
}

</mosaic_0001>

<llo_original>
// kernel: tpu_custom_call.1
$region0: #{tpu_custom_call.1}
  #allocation0 [shape = 'u32[]', space=smem, size = 0x4, offset = 0x4, fixed_abs, tag = 'smem constant byte address 0x4 - core index']
  #allocation1 [shape = 'u32[144,128]{1,0:T(1,128)}', space=vmem, size = 0x12000, scoped, tag = 'internal scratch']
  %s0 = inlined_call_operand.vmem [shape: s32[8,1], index: 0, kind: input, shape index: {}]
  %s1 = inlined_call_operand.vmem [shape: f32[8,32], index: 1, kind: input, shape index: {}]
  %s2 = inlined_call_operand.hbm [shape: f32[64,64], index: 2, kind: input, shape index: {}]
  %s3 = inlined_call_operand.hbm [shape: f32[64,64], index: 3, kind: input, shape index: {}]
  %s4 = inlined_call_operand.vmem [shape: f32[1,64], index: 4, kind: input, shape index: {}]
  %s5 = inlined_call_operand.vmem [shape: f32[1,64], index: 5, kind: input, shape index: {}]
  %s6 = inlined_call_operand.hbm [shape: f32[8,32], index: 6, kind: output, shape index: {}]
  %s7 = sld [smem:[#allocation0]]
  $region42: #{tpu_custom_call.1} parent=0
    _
  %s9 = ssub.s32 1, %s7
  %s10 = scalar_select 0, %s9, %s7
  $region1: #{tpu_custom_call.1} parent=0
    #allocation2 [shape = 'u8[32768]{0}', space=vmem, size = 0x8000, scoped, tag = 'input window, operand 2, single buffered']
    #allocation3 [shape = 's32[1]{0}', space=sflag, size = 0x4, scoped, tag = 'scoped memory for tpu_custom_call.1']
    #allocation4 [shape = 's32[1]{0}', space=sflag, size = 0x4, scoped, tag = 'scoped memory for tpu_custom_call.1']
    #allocation5 [shape = 'u8[32768]{0}', space=vmem, size = 0x8000, scoped, tag = 'input window, operand 3, single buffered']
    #allocation6 [shape = 's32[1]{0}', space=sflag, size = 0x4, scoped, tag = 'scoped memory for tpu_custom_call.1']
    #allocation7 [shape = 'u8[4096]{0}', space=vmem, size = 0x1000, scoped, tag = 'output window, operand 0, single buffered']
    %11 = vsyncpa [#allocation3], 0
    %12 = vsyncpa [#allocation6], 0
    %13 = vsyncpa [#allocation4], 0
    // Predicated region
    $region2: #{tpu_custom_call.1} parent=1 // pred_check
      _
    $region3: #{tpu_custom_call.1} parent=1 // pred_check_branch
      %15 = sbr.rel (0) target = $region5
    $region4: #{tpu_custom_call.1} parent=1 // pred_region
      _
    $region5: #{tpu_custom_call.1} parent=1 // pred_fallthru
      _
    // Predicated region
    $region6: #{tpu_custom_call.1} parent=1 // pred_check
      _
    $region7: #{tpu_custom_call.1} parent=1 // pred_check_branch
      %17 = sbr.rel (0) target = $region9
    $region8: #{tpu_custom_call.1} parent=1 // pred_region
      _
    $region9: #{tpu_custom_call.1} parent=1 // pred_fallthru
      _
    // Predicated region
    $region10: #{tpu_custom_call.1} parent=1 // pred_check
      _
    $region11: #{tpu_custom_call.1} parent=1 // pred_check_branch
      %19 = sbr.rel (0) target = $region13
    $region12: #{tpu_custom_call.1} parent=1 // pred_region
      %s21 = ssub.s32 1024, 1024
      %22 = vsyncadd [#allocation3], %s21
      %s23 = sshll.u32 [#allocation2], 4
      %s24 = int_to_ptr.vmem [resolvable:$true] %s23
      %29 = dma.hbm_to_vmem [thread:$0]  %s2, 1024, %s24, [#allocation3], 128, 128, 8
    $region13: #{tpu_custom_call.1} parent=1 // pred_fallthru
      _
    // Predicated region
    $region14: #{tpu_custom_call.1} parent=1 // pred_check
      _
    $region15: #{tpu_custom_call.1} parent=1 // pred_check_branch
      %31 = sbr.rel (0) target = $region17
    $region16: #{tpu_custom_call.1} parent=1 // pred_region
      %s33 = ssub.s32 1024, 1024
      %34 = vsyncadd [#allocation6], %s33
      %s35 = sshll.u32 [#allocation5], 4
      %s36 = int_to_ptr.vmem [resolvable:$true] %s35
      %41 = dma.hbm_to_vmem [thread:$0]  %s3, 1024, %s36, [#allocation6], 128, 128, 8
    $region17: #{tpu_custom_call.1} parent=1 // pred_fallthru
      _
    // Predicated region
    $region18: #{tpu_custom_call.1} parent=1 // pred_check
      _
    $region19: #{tpu_custom_call.1} parent=1 // pred_check_branch
      %43 = sbr.rel (0) target = $region21
    $region20: #{tpu_custom_call.1} parent=1 // pred_region
      _
    $region21: #{tpu_custom_call.1} parent=1 // pred_fallthru
      _
    // Predicated region
    $region22: #{tpu_custom_call.1} parent=1 // pred_check
      _
    $region23: #{tpu_custom_call.1} parent=1 // pred_check_branch
      %45 = sbr.rel (0) target = $region25
    $region24: #{tpu_custom_call.1} parent=1 // pred_region
      _
    $region25: #{tpu_custom_call.1} parent=1 // pred_fallthru
      _
    // Predicated region
    $region26: #{tpu_custom_call.1} parent=1 // pred_check
      _
    $region27: #{tpu_custom_call.1} parent=1 // pred_check_branch
      %47 = sbr.rel (0) target = $region29
    $region28: #{tpu_custom_call.1} parent=1 // pred_region
      %48 = dma.done [#allocation3], 1024
    $region29: #{tpu_custom_call.1} parent=1 // pred_fallthru
      _
    // Predicated region
    $region30: #{tpu_custom_call.1} parent=1 // pred_check
      _
    $region31: #{tpu_custom_call.1} parent=1 // pred_check_branch
      %50 = sbr.rel (0) target = $region33
    $region32: #{tpu_custom_call.1} parent=1 // pred_region
      %51 = dma.done [#allocation6], 1024
    $region33: #{tpu_custom_call.1} parent=1 // pred_fallthru
      _
    %v52 = vld [vmem:[%s0] sm:$0xff]
    %v53 = vld [vmem:[%s1] sm:$0xff]
    %v54 = vld [vmem:[#allocation2] sm:$0xff]
    %v55 = vld [vmem:[#allocation2 + $0x8] sm:$0xff]
    %v56 = vld [vmem:[#allocation2 + $0x10] sm:$0xff]
    %v57 = vld [vmem:[#allocation2 + $0x18] sm:$0xff]
    %v58 = vld [vmem:[#allocation2 + $0x20] sm:$0xff]
    %v59 = vld [vmem:[#allocation2 + $0x28] sm:$0xff]
    %v60 = vld [vmem:[#allocation2 + $0x30] sm:$0xff]
    %v61 = vld [vmem:[#allocation2 + $0x38] sm:$0xff]
    %v62 = vld [vmem:[#allocation5] sm:$0xff]
    %v63 = vld [vmem:[#allocation5 + $0x8] sm:$0xff]
    %v64 = vld [vmem:[#allocation5 + $0x10] sm:$0xff]
    %v65 = vld [vmem:[#allocation5 + $0x18] sm:$0xff]
    %v66 = vld [vmem:[#allocation5 + $0x20] sm:$0xff]
    %v67 = vld [vmem:[#allocation5 + $0x28] sm:$0xff]
    %v68 = vld [vmem:[#allocation5 + $0x30] sm:$0xff]
    %v69 = vld [vmem:[#allocation5 + $0x38] sm:$0xff]
    %v70 = vld [vmem:[%s4] sm:$0x1]
    %v71 = vld [vmem:[%s5] sm:$0x1]
    %vm72 = vcmp.ge.s32.totalorder %v52, 32
    %v73 = vsel %vm72, 2, %v52
    %v74 = vlaneseq
    %v75 = vand.u32 %v74, 127
    %76 = vset.pattern.permute.xlu0 0
    %77 = vperm.xlu0 %76, %v73
    %v78 = vpop.permute.xlu0 %77
    %vm79 = vcmp.eq.s32.totalorder %v75, %v78
    %v80 = vsel %vm79, 1, 0
    %v81 = vcvt.s32.f32 %v80
    %83 = vrot.lane.b32.xlu0 %v53, 32
    %v84 = vpop.permute.xlu0 %83
    %vm86 = vcmask 261120
    %v87 = vsel %vm86, %v81, %v84
    %v89 = vlaneseq
    %v90 = vshrl.u32 %v89, 7
    %v91 = vsub.s32 0, %v90
    %v92 = vrot.slane %v70, %v91
    %vm94 = vcmask 523264
    %v96 = vsel %vm94, %v87, 0
    %98 = vmatprep.subr.mxu0 0.0
    %99 = vmatpush1.msra.mxu0 0.0
    %100 = vmatprep.subr.mxu0 0.0
    %101 = vmatpush1.msra.mxu0 0.0
    %102 = vmatprep.subr.mxu0 0.0
    %103 = vmatpush1.msra.mxu0 0.0
    %104 = vmatprep.subr.mxu0 0.0
    %105 = vmatpush1.msra.mxu0 0.0
    %106 = vmatprep.subr.mxu0 0.0
    %107 = vmatpush1.msra.mxu0 0.0
    %108 = vmatprep.subr.mxu0 0.0
    %109 = vmatpush1.msra.mxu0 0.0
    %110 = vmatprep.subr.mxu0 0.0
    %111 = vmatpush1.msra.mxu0 0.0
    %112 = vmatprep.subr.mxu0 0.0
    %113 = vmatpush1.msra.mxu0 0.0
    %114 = vmatprep.subr.mxu0 0.0
    %115 = vmatpush1.msra.mxu0 %v61
    %116 = vmatprep.subr.mxu0 0.0
    %117 = vmatpush1.msra.mxu0 %v60
    %118 = vmatprep.subr.mxu0 0.0
    %119 = vmatpush1.msra.mxu0 %v59
    %120 = vmatprep.subr.mxu0 0.0
    %121 = vmatpush1.msra.mxu0 %v58
    %122 = vmatprep.subr.mxu0 0.0
    %123 = vmatpush1.msra.mxu0 %v57
    %124 = vmatprep.subr.mxu0 0.0
    %125 = vmatpush1.msra.mxu0 %v56
    %126 = vmatprep.subr.mxu0 0.0
    %127 = vmatpush1.msra.mxu0 %v55
    %128 = vmatprep.subr.mxu0 0.0
    %129 = vmatpush1.msra.mxu0 %v54
    %130 = vmatprep.subr.mxu0 0.0
    %131 = vmatpush2.msra.mxu0 0.0
    %132 = vmatprep.subr.mxu0 0.0
    %133 = vmatpush2.msra.mxu0 0.0
    %134 = vmatprep.subr.mxu0 0.0
    %135 = vmatpush2.msra.mxu0 0.0
    %136 = vmatprep.subr.mxu0 0.0
    %137 = vmatpush2.msra.mxu0 0.0
    %138 = vmatprep.subr.mxu0 0.0
    %139 = vmatpush2.msra.mxu0 0.0
    %140 = vmatprep.subr.mxu0 0.0
    %141 = vmatpush2.msra.mxu0 0.0
    %142 = vmatprep.subr.mxu0 0.0
    %143 = vmatpush2.msra.mxu0 0.0
    %144 = vmatprep.subr.mxu0 0.0
    %145 = vmatpush2.msra.mxu0 0.0
    %146 = vmatprep.subr.mxu0 0.0
    %147 = vmatpush2.msra.mxu0 0.0
    %148 = vmatprep.subr.mxu0 0.0
    %149 = vmatpush2.msra.mxu0 0.0
    %150 = vmatprep.subr.mxu0 0.0
    %151 = vmatpush2.msra.mxu0 0.0
    %152 = vmatprep.subr.mxu0 0.0
    %153 = vmatpush2.msra.mxu0 0.0
    %154 = vmatprep.subr.mxu0 0.0
    %155 = vmatpush2.msra.mxu0 0.0
    %156 = vmatprep.subr.mxu0 0.0
    %157 = vmatpush2.msra.mxu0 0.0
    %158 = vmatprep.subr.mxu0 0.0
    %159 = vmatpush2.msra.mxu0 0.0
    %160 = vmatprep.subr.mxu0 0.0
    %161 = vmatpush2.msra.mxu0 0.0
    %162 = vmatprep.mubr.f32.mxu0 0.0
    %163 = vmatmul.mubr.f32.gmra.mxu0 %v96
    %v164 = vpop.f32.mrf.mxu0
    %v165 = vadd.f32 %v92, %v164
    %v166 = vpop.f32.mrf.mxu0
    %167 = vdwg.mxu0
    %v168 = vxor.u32 %v165, 2147483648
    %v169 = vmul.f32 %v168, 1.442695
    %v170 = vpow.pop %v169
    %v171 = vadd.f32 %v170, 1.0
    %v172 = vrcp.pop %v171
    %v173 = vmul.f32 1.0, %v172
    %v175 = vlaneseq
    %v176 = vshrl.u32 %v175, 7
    %v177 = vsub.s32 0, %v176
    %v178 = vrot.slane %v71, %v177
    %180 = vmatprep.subr.mxu0 0.0
    %181 = vmatpush1.msra.mxu0 0.0
    %182 = vmatprep.subr.mxu0 0.0
    %183 = vmatpush1.msra.mxu0 0.0
    %184 = vmatprep.subr.mxu0 0.0
    %185 = vmatpush1.msra.mxu0 0.0
    %186 = vmatprep.subr.mxu0 0.0
    %187 = vmatpush1.msra.mxu0 0.0
    %188 = vmatprep.subr.mxu0 0.0
    %189 = vmatpush1.msra.mxu0 0.0
    %190 = vmatprep.subr.mxu0 0.0
    %191 = vmatpush1.msra.mxu0 0.0
    %192 = vmatprep.subr.mxu0 0.0
    %193 = vmatpush1.msra.mxu0 0.0
    %194 = vmatprep.subr.mxu0 0.0
    %195 = vmatpush1.msra.mxu0 0.0
    %196 = vmatprep.subr.mxu0 0.0
    %197 = vmatpush1.msra.mxu0 %v69
    %198 = vmatprep.subr.mxu0 0.0
    %199 = vmatpush1.msra.mxu0 %v68
    %200 = vmatprep.subr.mxu0 0.0
    %201 = vmatpush1.msra.mxu0 %v67
    %202 = vmatprep.subr.mxu0 0.0
    %203 = vmatpush1.msra.mxu0 %v66
    %204 = vmatprep.subr.mxu0 0.0
    %205 = vmatpush1.msra.mxu0 %v65
    %206 = vmatprep.subr.mxu0 0.0
    %207 = vmatpush1.msra.mxu0 %v64
    %208 = vmatprep.subr.mxu0 0.0
    %209 = vmatpush1.msra.mxu0 %v63
    %210 = vmatprep.subr.mxu0 0.0
    %211 = vmatpush1.msra.mxu0 %v62
    %212 = vmatprep.subr.mxu0 0.0
    %213 = vmatpush2.msra.mxu0 0.0
    %214 = vmatprep.subr.mxu0 0.0
    %215 = vmatpush2.msra.mxu0 0.0
    %216 = vmatprep.subr.mxu0 0.0
    %217 = vmatpush2.msra.mxu0 0.0
    %218 = vmatprep.subr.mxu0 0.0
    %219 = vmatpush2.msra.mxu0 0.0
    %220 = vmatprep.subr.mxu0 0.0
    %221 = vmatpush2.msra.mxu0 0.0
    %222 = vmatprep.subr.mxu0 0.0
    %223 = vmatpush2.msra.mxu0 0.0
    %224 = vmatprep.subr.mxu0 0.0
    %225 = vmatpush2.msra.mxu0 0.0
    %226 = vmatprep.subr.mxu0 0.0
    %227 = vmatpush2.msra.mxu0 0.0
    %228 = vmatprep.subr.mxu0 0.0
    %229 = vmatpush2.msra.mxu0 0.0
    %230 = vmatprep.subr.mxu0 0.0
    %231 = vmatpush2.msra.mxu0 0.0
    %232 = vmatprep.subr.mxu0 0.0
    %233 = vmatpush2.msra.mxu0 0.0
    %234 = vmatprep.subr.mxu0 0.0
    %235 = vmatpush2.msra.mxu0 0.0
    %236 = vmatprep.subr.mxu0 0.0
    %237 = vmatpush2.msra.mxu0 0.0
    %238 = vmatprep.subr.mxu0 0.0
    %239 = vmatpush2.msra.mxu0 0.0
    %240 = vmatprep.subr.mxu0 0.0
    %241 = vmatpush2.msra.mxu0 0.0
    %242 = vmatprep.subr.mxu0 0.0
    %243 = vmatpush2.msra.mxu0 0.0
    %244 = vmatprep.mubr.f32.mxu0 0.0
    %245 = vmatmul.mubr.f32.gmra.mxu0 %v96
    %v246 = vpop.f32.mrf.mxu0
    %v247 = vadd.f32 %v178, %v246
    %v248 = vpop.f32.mrf.mxu0
    %249 = vdwg.mxu0
    %251 = vrot.lane.b32.xlu0 %v247, 96
    %v252 = vpop.permute.xlu0 %251
    %v254 = vmul.f32 %v173, %v252
    %v255 = vadd.f32 %v247, %v254
    %v256 = vtanh.pop %v255
    %v257 = vsub.f32 1.0, %v173
    %259 = vrot.lane.b32.xlu0 %v256, 32
    %v260 = vpop.permute.xlu0 %259
    %v262 = vmul.f32 %v257, %v260
    %v263 = vmul.f32 %v173, %v84
    %v264 = vadd.f32 %v262, %v263
    %266 = vrot.lane.b32.xlu0 %v264, 96
    %v267 = vpop.permute.xlu0 %266
    %269 = vst.msk [vmem:[#allocation7] sm:$0xff] %vm86, %v267
    // Predicated region
    $region34: #{tpu_custom_call.1} parent=1 // pred_check
      _
    $region35: #{tpu_custom_call.1} parent=1 // pred_check_branch
      %271 = sbr.rel (0) target = $region37
    $region36: #{tpu_custom_call.1} parent=1 // pred_region
      %s273 = ssub.s32 128, 128
      %274 = vsyncadd [#allocation4], %s273
      %s276 = sshll.u32 [#allocation7], 4
      %s277 = int_to_ptr.vmem [resolvable:$true] %s276
      %279 = dma.vmem_to_hbm [thread:$0]  %s277, 128, %s6, [#allocation4]
    $region37: #{tpu_custom_call.1} parent=1 // pred_fallthru
      _
    // Predicated region
    $region38: #{tpu_custom_call.1} parent=1 // pred_check
      _
    $region39: #{tpu_custom_call.1} parent=1 // pred_check_branch
      %281 = sbr.rel (0) target = $region41
    $region40: #{tpu_custom_call.1} parent=1 // pred_region
      %282 = dma.done [#allocation4], 128
    $region41: #{tpu_custom_call.1} parent=1 // pred_fallthru
      _
    %283 = vsyncpa [#allocation3], 1
    %284 = vsyncpa [#allocation6], 1
    %285 = vsyncpa [#allocation4], 1

</llo_original>
